<compile_context>
chip_gen: v7x
topology: tpu7x:2x2x1
jax: 0.10.0
libtpu: 0.0.40
codegen_flags: <defaults>
</compile_context>

<pallas_src>
import functools

import jax
import jax.numpy as jnp
from jax.experimental import pallas as pl
from jax.experimental.pallas import tpu as pltpu


# ----------------------------------------------------------------------------
# Helpers
# ----------------------------------------------------------------------------
def _vmem_limit_bytes():
    """Generation-aware scoped-VMEM budget: ~75% of physical VMEM.

    v5e/v6e (128 MiB physical) -> 96 MiB, v7x (64 MiB physical) -> 48 MiB.
    Falls back to 48 MiB (safe on every generation) if the query fails."""
    try:
        cap = int(pltpu.get_tpu_info().vmem_capacity_bytes)
    except Exception:  # pragma: no cover — conservative fallback
        cap = 64 * 1024 * 1024
    return (cap * 3) // 4


def _pick_lane_tile(total, batch, *, target=512, min_steps=8):
    """Tile for the lane (HW) axis: a multiple of 128 dividing `total`.

    Prefer large tiles (up to `target`) — 128-lane tiles were measured at ~29% of the
    HBM roofline vs 85%+ at 512–1024 — but shrink (never below 128) when the grid would
    otherwise be too shallow to feed both v7x TensorCores / the auto-pipeliner."""
    if total % 128 != 0 or total <= 128:
        return total  # full-dim blocks are always layout-legal
    divisors = [t for t in range(128, total + 1, 128) if total % t == 0]
    candidates = [t for t in divisors if t <= target] or divisors[:1]
    tile = candidates[-1]
    while batch * (total // tile) < min_steps and candidates.index(tile) > 0:
        tile = candidates[candidates.index(tile) - 1]
    return tile


def _pick_q_tile(q):
    """Query-axis tile: a divisor of Q that is 8-aligned, else the full axis."""
    if q % 8 != 0:
        return q
    for t in (64, 32, 16, 8):
        if q % t == 0:
            return t
    return q


# ----------------------------------------------------------------------------
# Kernel 1: fused input_proj (1x1 conv) + k_linear (1x1 conv)
#   channels-on-sublane / HW-on-lane: every tile is (D, hw_tile) -> lane-dense stores
# ----------------------------------------------------------------------------
def _proj_k_kernel(x_ref, wp_ref, bp_ref, wk_ref, bk_ref, o_ref):
    # x_ref:  (1, Cin, THW) bf16      wp_ref: (D, Cin) bf16  (torch (out,in), used as W@x)
    # bp_ref: (D, 1) f32              wk_ref: (D, D)   bf16  bk_ref: (D, 1) f32
    # o_ref:  (1, D, THW) bf16  — k = Wk @ (Wp @ x + bp) + bk, per pixel
    x = x_ref[0]                                                     # (Cin, THW)
    mem = jnp.dot(wp_ref[...], x,
                  preferred_element_type=jnp.float32) + bp_ref[...]  # (D, THW) f32
    k = jnp.dot(wk_ref[...], mem.astype(jnp.bfloat16),
                preferred_element_type=jnp.float32) + bk_ref[...]    # (D, THW) f32
    o_ref[0] = k.astype(o_ref.dtype)


def input_proj_k_fused(x_chw, w_proj, b_proj, w_k, b_k, *, out_dtype=jnp.bfloat16):
    """Fused per-pixel matmuls: input_proj 1x1-conv followed by the MHA k_linear.

    x_chw: (B, Cin, HW) — NCHW with spatial flattened, no transpose needed.
    w_proj: (D, Cin), w_k: (D, D) in torch (out, in) layout.  Returns k_lin (B, D, HW)."""
    B, Cin, HW = x_chw.shape
    D = w_proj.shape[0]
    hw_tile = _pick_lane_tile(HW, B)
    n_hw = HW // hw_tile

    x_bf = x_chw.astype(jnp.bfloat16)
    wp_bf = jnp.asarray(w_proj, jnp.bfloat16)
    wk_bf = jnp.asarray(w_k, jnp.bfloat16)
    bp = jnp.asarray(b_proj, jnp.float32).reshape(D, 1)
    bk = jnp.asarray(b_k, jnp.float32).reshape(D, 1)

    # NOTE: at real DETR channel counts (Cin~2048) a third "arbitrary" K-axis with an f32
    # VMEM accumulator should be added instead of loading all of Cin per step; at Cin=4
    # the whole reduction fits in a single block.
    # NOTE: constant-index weight/bias blocks stay resident; they are small enough here
    # that skipping pl.Buffered(1) single-buffering costs only a few KiB of VMEM.
    return pl.pallas_call(
        _proj_k_kernel,
        out_shape=jax.ShapeDtypeStruct((B, D, HW), out_dtype),
        grid=(B, n_hw),
        in_specs=[
            pl.BlockSpec((1, Cin, hw_tile), lambda b, t: (b, 0, t)),
            pl.BlockSpec((D, Cin), lambda b, t: (0, 0)),
            pl.BlockSpec((D, 1), lambda b, t: (0, 0)),
            pl.BlockSpec((D, D), lambda b, t: (0, 0)),
            pl.BlockSpec((D, 1), lambda b, t: (0, 0)),
        ],
        out_specs=pl.BlockSpec((1, D, hw_tile), lambda b, t: (b, 0, t)),
        compiler_params=pltpu.CompilerParams(
            dimension_semantics=("parallel", "parallel"),
            vmem_limit_bytes=_vmem_limit_bytes()),
    )(x_bf, wp_bf, bp, wk_bf, bk)


# ----------------------------------------------------------------------------
# Kernel 2: MHAttentionMap (q linear + masked joint softmax over heads*HW)
#   k is already projected (fused into kernel 1); output is query-major (B, Q, nh*HW)
# ----------------------------------------------------------------------------
def _attn_map_kernel(q_ref, k_ref, bias_ref, wqT_ref, bq_ref, o_ref, *, num_heads, norm):
    # q_ref:   (1, tq, D) bf16        k_ref:  (1, D, HW) bf16  (pre-projected k)
    # bias_ref:(1, 1, HW) f32 additive padding mask (-1e30 on padded pixels, 0 elsewhere)
    # wqT_ref: (D, D) bf16 pre-transposed (y = x @ W^T + b)    bq_ref: (1, D) f32
    # o_ref:   (1, tq, num_heads*HW) f32  — query-major, heads flattened on the lane axis
    tq = q_ref.shape[1]
    d = q_ref.shape[2]
    hw = k_ref.shape[2]
    c = d // num_heads

    # nn.Linear q-path (weights pre-transposed in the wrapper, no in-kernel transpose).
    q_lin = jnp.dot(q_ref[0], wqT_ref[...],
                    preferred_element_type=jnp.float32) + bq_ref[...]       # (tq, D)

    # Head-batched scaled QK^T: one einsum on the MXU (bf16 operands, f32 accumulation).
    qh = (q_lin * norm).astype(jnp.bfloat16).reshape(tq, num_heads, c)
    kh = k_ref[0].reshape(num_heads, c, hw)                                 # (nh, c, HW)
    s = jnp.einsum('qhc,hck->hqk', qh, kh,
                   preferred_element_type=jnp.float32)                      # (nh, tq, HW)

    # Additive padding mask (broadcasts over heads and queries).  exp underflows to 0 at
    # masked pixels; fully-masked rows stay finite (semantic diff vs torch's NaN).
    s = s + bias_ref[...]

    # Joint softmax over (heads * HW) per query: one lane reduce + a tiny cross-head
    # reduce, normalized with the EUP approx reciprocal (separate issue slot, ~free).
    m = jnp.max(jnp.max(s, axis=-1, keepdims=True), axis=0, keepdims=True)  # (1, tq, 1)
    e = jnp.exp(s - m)                                                      # (nh, tq, HW)
    denom = jnp.sum(jnp.sum(e, axis=-1, keepdims=True), axis=0, keepdims=True)
    inv = pl.reciprocal(denom[0], approx=True)                              # (tq, 1)

    # Lane-dense stores: each head's slab is a 128-aligned static lane slice of the
    # query-major output block — no post-kernel head/query transpose needed.
    for h in range(num_heads):
        o_ref[0, :, h * hw:(h + 1) * hw] = e[h] * inv


def mha_attention_map(hs_last, k_lin, mask_bool, wq, bq, num_heads):
    """hs_last: (B, Q, D); k_lin: (B, D, HW) pre-projected k; mask_bool: (B, HW) bool
    (True = padded).  Returns attention weights of shape (B, Q, num_heads*HW)."""
    B, Q, D = hs_last.shape
    HW = k_lin.shape[-1]
    norm = float(D / num_heads) ** (-0.5)

    # Pre-transpose (torch nn.Linear stores (out, in)) + bf16 cast once, in the wrapper.
    wqT = jnp.asarray(wq.T, jnp.bfloat16)
    bq_f32 = jnp.asarray(bq, jnp.float32).reshape(1, D)

    # One precomputed additive mask instead of per-head in-kernel selects.
    bias = jnp.where(mask_bool[:, None, :], jnp.float32(-1e30), jnp.float32(0.0))

    q_bf = hs_last.astype(jnp.bfloat16)

    tq = _pick_q_tile(Q)
    n_q = Q // tq

    kernel = functools.partial(_attn_map_kernel, num_heads=num_heads, norm=norm)
    return pl.pallas_call(
        kernel,
        out_shape=jax.ShapeDtypeStruct((B, Q, num_heads * HW), jnp.float32),
        grid=(B, n_q),
        in_specs=[
            pl.BlockSpec((1, tq, D), lambda b, qi: (b, qi, 0)),
            pl.BlockSpec((1, D, HW), lambda b, qi: (b, 0, 0)),
            pl.BlockSpec((1, 1, HW), lambda b, qi: (b, 0, 0)),
            pl.BlockSpec((D, D), lambda b, qi: (0, 0)),
            pl.BlockSpec((1, D), lambda b, qi: (0, 0)),
        ],
        out_specs=pl.BlockSpec((1, tq, num_heads * HW), lambda b, qi: (b, qi, 0)),
        compiler_params=pltpu.CompilerParams(
            dimension_semantics=("parallel", "parallel"),
            vmem_limit_bytes=_vmem_limit_bytes()),
    )(q_bf, k_lin, bias, wqT, bq_f32)


# ----------------------------------------------------------------------------
# DETRExtractor (Pallas version)
# ----------------------------------------------------------------------------
class DETRExtractorPallas:
    def __init__(self, key, *, backbone_channels=4, hidden_dim=32, nheads=4,
                 num_queries=8):
        self.backbone_hidden_dim = backbone_channels
        self.hidden_dim = hidden_dim
        self.nheads = nheads
        self.num_queries = num_queries

        ks = jax.random.split(key, 5)

        # input_proj: Conv2d(backbone_channels, hidden_dim, kernel_size=1)
        # Stored in torch (out, in) layout — used directly as W @ x in the kernel.
        bound = 1.0 / float(backbone_channels) ** 0.5
        self.proj_w = jax.random.uniform(
            ks[0], (hidden_dim, backbone_channels), jnp.float32, -bound, bound)
        self.proj_b = jax.random.uniform(
            ks[1], (hidden_dim,), jnp.float32, -bound, bound)

        # query_embed: nn.Embedding(num_queries, hidden_dim) ~ N(0,1)
        self.query_embed = jax.random.normal(
            ks[2], (num_queries, hidden_dim), jnp.float32)

        # MHAttentionMap: xavier_uniform weights in torch (out, in) layout, zero biases.
        xavier = float(6.0 / (hidden_dim + hidden_dim)) ** 0.5
        self.q_w = jax.random.uniform(
            ks[3], (hidden_dim, hidden_dim), jnp.float32, -xavier, xavier)
        self.k_w = jax.random.uniform(
            ks[4], (hidden_dim, hidden_dim), jnp.float32, -xavier, xavier)
        self.q_b = jnp.zeros((hidden_dim,), jnp.float32)
        self.k_b = jnp.zeros((hidden_dim,), jnp.float32)

    def forward(self, src_nchw, mask):
        """src_nchw: (B, C_bb, H, W) float32 backbone feature map (NCHW, like torch).
        mask: (B, H, W) bool, True on padded pixels."""
        B, C, H, W = src_nchw.shape
        HW = H * W

        # Keep NCHW: channels on sublanes, HW on lanes (free reshape, no HBM transpose).
        src_chw = src_nchw.reshape(B, C, HW)

        # TODO(synk): backbone + Transformer encoder/decoder are external (build_backbone,
        # DETR Transformer) and not provided; use deterministic surrogates:
        #   memory := input_proj(src),  hs[-1] := query embeddings broadcast over batch.
        # Since `memory` only feeds the attention k-path here, the input_proj 1x1-conv and
        # the k_linear 1x1-conv are fused into one kernel emitting k_lin directly (saves a
        # full HBM round trip of the projected feature map).
        k_lin = input_proj_k_fused(
            src_chw, self.proj_w, self.proj_b, self.k_w, self.k_b)   # (B, D, HW) bf16

        hs_last = jnp.broadcast_to(
            self.query_embed[None, :, :], (B, self.num_queries, self.hidden_dim))
        hs = hs_last[None]  # (num_dec_layers=1, B, Q, D)

        # bbox_attention (Pallas MHAttentionMap kernel). Output is query-major
        # (B, Q, nheads*HW) so the torch (B, Q, nheads, H, W) view is a free reshape.
        attn = mha_attention_map(
            hs_last, k_lin, mask.reshape(B, HW),
            self.q_w, self.q_b, self.nheads)                          # (B, Q, nh*HW)
        bbox_mask = attn.reshape(B, self.num_queries, self.nheads, H, W)

        # Reference forward returns (hs, (src, mask)); bbox_mask exposed as well.
        return (hs, (src_nchw, mask)), bbox_mask


if __name__ == "__main__":
    key = jax.random.PRNGKey(0)
    k_model, k_src = jax.random.split(key)

    B, C_bb, H, W = 2, 4, 16, 16        # small backbone feature map (HW = 256)
    hidden_dim, nheads, num_queries = 32, 4, 8

    model = DETRExtractorPallas(
        k_model, backbone_channels=C_bb, hidden_dim=hidden_dim,
        nheads=nheads, num_queries=num_queries)

    src = jax.random.normal(k_src, (B, C_bb, H, W), jnp.float32)
    # padding mask: last four columns of each image are padded
    col = jnp.arange(W)[None, None, :]
    mask = jnp.broadcast_to(col >= W - 4, (B, H, W))

    (hs, (src_out, mask_out)), bbox_mask = model.forward(src, mask)
    jax.block_until_ready((hs, src_out, mask_out, bbox_mask))

    assert hs.shape == (1, B, num_queries, hidden_dim)
    assert bbox_mask.shape == (B, num_queries, nheads, H, W)
    # softmax over (heads*H*W) per (batch, query) must sum to ~1
    # (bf16 matmul operands + approx EUP reciprocal => slightly looser tolerance)
    sums = bbox_mask.reshape(B, num_queries, -1).sum(-1)
    assert bool(jnp.allclose(sums, 1.0, atol=5e-3)), sums
    # padded columns must receive zero attention
    assert bool(jnp.all(bbox_mask[:, :, :, :, W - 4:] == 0.0))
    assert bool(jnp.all(jnp.isfinite(bbox_mask)))

    print("KERNEL_OK")
</pallas_src>

<mosaic_0001>
module attributes {stable_mosaic.version = 11 : i64} {
  func.func @_proj_k_kernel(%arg0: i32, %arg1: i32, %arg2: memref<1x4x128xbf16, #tpu.memory_space<vmem>>, %arg3: memref<32x4xbf16, #tpu.memory_space<vmem>>, %arg4: memref<32x1xf32, #tpu.memory_space<vmem>>, %arg5: memref<32x32xbf16, #tpu.memory_space<vmem>>, %arg6: memref<32x1xf32, #tpu.memory_space<vmem>>, %arg7: memref<1x32x128xbf16, #tpu.memory_space<vmem>>) attributes {dimension_semantics = [#tpu.dimension_semantics<parallel>, #tpu.dimension_semantics<parallel>], iteration_bounds = array<i64: 2, 2>, scalar_prefetch = 0 : i64, scratch_operands = 0 : i64, tpu.core_type = #tpu.core_type<tc>, window_params = [{transform_indices = @transform_0, window_bounds = array<i64: 1, 4, 128>}, {pipeline_mode = #tpu.pipeline_mode<synchronous>, transform_indices = @transform_1, window_bounds = array<i64: 32, 4>}, {pipeline_mode = #tpu.pipeline_mode<synchronous>, transform_indices = @transform_2, window_bounds = array<i64: 32, 1>}, {pipeline_mode = #tpu.pipeline_mode<synchronous>, transform_indices = @transform_3, window_bounds = array<i64: 32, 32>}, {pipeline_mode = #tpu.pipeline_mode<synchronous>, transform_indices = @transform_4, window_bounds = array<i64: 32, 1>}, {transform_indices = @transform_5, window_bounds = array<i64: 1, 32, 128>}]} {
    %c0 = arith.constant 0 : index
    %c0_0 = arith.constant 0 : index
    %c0_1 = arith.constant 0 : index
    %0 = vector.load %arg2[%c0, %c0_0, %c0_1] : memref<1x4x128xbf16, #tpu.memory_space<vmem>>, vector<1x4x128xbf16>
    %1 = vector.shape_cast %0 : vector<1x4x128xbf16> to vector<4x128xbf16>
    %c0_2 = arith.constant 0 : index
    %c0_3 = arith.constant 0 : index
    %2 = vector.load %arg3[%c0_2, %c0_3] : memref<32x4xbf16, #tpu.memory_space<vmem>>, vector<32x4xbf16>
    %cst = arith.constant dense<0.000000e+00> : vector<32x128xf32>
    %3 = tpu.matmul %2, %1, %cst {dimension_numbers = #tpu.dot_dimension_numbers<[1], [0], [0], [1], [0, 0, 1, 1], [], []>} : vector<32x4xbf16>, vector<4x128xbf16>, vector<32x128xf32> -> vector<32x128xf32>
    %c0_4 = arith.constant 0 : index
    %c0_5 = arith.constant 0 : index
    %4 = vector.load %arg4[%c0_4, %c0_5] : memref<32x1xf32, #tpu.memory_space<vmem>>, vector<32x1xf32>
    %5 = vector.broadcast %4 : vector<32x1xf32> to vector<32x128xf32>
    %6 = arith.addf %3, %5 : vector<32x128xf32>
    %c0_6 = arith.constant 0 : index
    %c0_7 = arith.constant 0 : index
    %7 = vector.load %arg5[%c0_6, %c0_7] : memref<32x32xbf16, #tpu.memory_space<vmem>>, vector<32x32xbf16>
    %8 = arith.truncf %6 : vector<32x128xf32> to vector<32x128xbf16>
    %cst_8 = arith.constant dense<0.000000e+00> : vector<32x128xf32>
    %9 = tpu.matmul %7, %8, %cst_8 {dimension_numbers = #tpu.dot_dimension_numbers<[1], [0], [0], [1], [0, 0, 1, 1], [], []>} : vector<32x32xbf16>, vector<32x128xbf16>, vector<32x128xf32> -> vector<32x128xf32>
    %c0_9 = arith.constant 0 : index
    %c0_10 = arith.constant 0 : index
    %10 = vector.load %arg6[%c0_9, %c0_10] : memref<32x1xf32, #tpu.memory_space<vmem>>, vector<32x1xf32>
    %11 = vector.broadcast %10 : vector<32x1xf32> to vector<32x128xf32>
    %12 = arith.addf %9, %11 : vector<32x128xf32>
    %13 = arith.truncf %12 : vector<32x128xf32> to vector<32x128xbf16>
    %c0_11 = arith.constant 0 : index
    %c0_12 = arith.constant 0 : index
    %c0_13 = arith.constant 0 : index
    %14 = vector.load %arg7[%c0_11, %c0_12, %c0_13] : memref<1x32x128xbf16, #tpu.memory_space<vmem>>, vector<1x32x128xbf16>
    %15 = vector.shape_cast %14 : vector<1x32x128xbf16> to vector<32x128xbf16>
    %16 = vector.shape_cast %13 : vector<32x128xbf16> to vector<1x32x128xbf16>
    tpu.vector_store %arg7[%c0_11, %c0_12, %c0_13], %16 {strides = array<i32>} : memref<1x32x128xbf16, #tpu.memory_space<vmem>>, vector<1x32x128xbf16>,
    return
  }
  func.func @transform_0(%arg0: i32, %arg1: i32) -> (i32, i32, i32) {
    %c0_i32 = arith.constant 0 : i32
    %c0_i32_0 = arith.constant 0 : i32
    return %arg0, %c0_i32, %arg1 : i32, i32, i32
  }
  func.func @transform_1(%arg0: i32, %arg1: i32) -> (i32, i32) {
    %c0_i32 = arith.constant 0 : i32
    %c0_i32_0 = arith.constant 0 : i32
    %c0_i32_1 = arith.constant 0 : i32
    return %c0_i32, %c0_i32_0 : i32, i32
  }
  func.func @transform_2(%arg0: i32, %arg1: i32) -> (i32, i32) {
    %c0_i32 = arith.constant 0 : i32
    %c0_i32_0 = arith.constant 0 : i32
    %c0_i32_1 = arith.constant 0 : i32
    return %c0_i32, %c0_i32_0 : i32, i32
  }
  func.func @transform_3(%arg0: i32, %arg1: i32) -> (i32, i32) {
    %c0_i32 = arith.constant 0 : i32
    %c0_i32_0 = arith.constant 0 : i32
    %c0_i32_1 = arith.constant 0 : i32
    return %c0_i32, %c0_i32_0 : i32, i32
  }
  func.func @transform_4(%arg0: i32, %arg1: i32) -> (i32, i32) {
    %c0_i32 = arith.constant 0 : i32
    %c0_i32_0 = arith.constant 0 : i32
    %c0_i32_1 = arith.constant 0 : i32
    return %c0_i32, %c0_i32_0 : i32, i32
  }
  func.func @transform_5(%arg0: i32, %arg1: i32) -> (i32, i32, i32) {
    %c0_i32 = arith.constant 0 : i32
    %c0_i32_0 = arith.constant 0 : i32
    return %arg0, %c0_i32, %arg1 : i32, i32, i32
  }
}

</mosaic_0001>

<llo_original>
// kernel: tpu_custom_call.1
$region0: #{tpu_custom_call.1}
  #allocation0 [shape = 'u32[]', space=smem, size = 0x4, offset = 0x4, fixed_abs, tag = 'smem constant byte address 0x4 - core index']
  #allocation1 [shape = 'u32[144,128]{1,0:T(1,128)}', space=vmem, size = 0x12000, scoped, tag = 'internal scratch']
  %s0 = inlined_call_operand.vmem [shape: bf16[2,4,256], index: 0, kind: input, shape index: {}]
  %s1 = inlined_call_operand.vmem [shape: bf16[32,4], index: 1, kind: input, shape index: {}]
  %s2 = inlined_call_operand.vmem [shape: f32[32,1], index: 2, kind: input, shape index: {}]
  %s3 = inlined_call_operand.vmem [shape: bf16[32,32], index: 3, kind: input, shape index: {}]
  %s4 = inlined_call_operand.vmem [shape: f32[32,1], index: 4, kind: input, shape index: {}]
  %s5 = inlined_call_operand.hbm [shape: bf16[2,32,256], index: 5, kind: output, shape index: {}]
  %s6 = sld [smem:[#allocation0]]
  $region53: #{tpu_custom_call.1} parent=0
    _
  %s8 = ssub.s32 1, %s6
  %s9 = scalar_select 0, %s8, %s6
  $region1: #{tpu_custom_call.1} parent=0
    #allocation2 [shape = 'u8[16384]{0}', space=vmem, size = 0x4000, scoped, tag = 'output window, operand 0']
    #allocation3 [shape = 's32[2]{0}', space=sflag, size = 0x8, scoped, tag = 'scoped memory for tpu_custom_call.1']
    %10 = vsyncpa [#allocation3], 0
    %s11 = scalar_lea.sflag [#allocation3], 1
    %12 = vsyncpa %s11, 0
    loop: start=0, step=1, limit=6
    $region2: #{tpu_custom_call.1} parent=1 // loop_pre_header
      _
    $region3: #{tpu_custom_call.1} parent=1 // loop_header
      %s14 = sphi 0, %s18
      %p15 = scmp.ge.s32.totalorder %s14, 6
      %s21 = sphi 0, %s33
      %s22 = sphi 0, %s29
      %s23 = sphi 0, %s21
      %s24 = sphi 0, %s22
      %s25 = sphi 0, %s23
      %s26 = sphi 0, %s24
      %s38 = sphi 0, %s40
      %s41 = sphi 0, %s38
      %s42 = sphi 0, %s41
      %s58 = sphi 0, %s42
      %s62 = sphi 0, %s62
      %s64 = sphi 0, %s62
      %s65 = sphi 0, %s64
      %s79 = sphi 0, %s65
      %s83 = sphi 0, %s83
      %s85 = sphi 0, %s83
      %s86 = sphi 0, %s85
      %s100 = sphi 0, %s86
      %s104 = sphi 0, %s104
      %s106 = sphi 0, %s104
      %s107 = sphi 0, %s106
      %s121 = sphi 0, %s107
      %s125 = sphi 0, %s125
      %s127 = sphi 0, %s125
      %s128 = sphi 0, %s127
      %s142 = sphi 0, %s128
      %s150 = sphi 0, %s152
      %s153 = sphi 0, %s150
      %s154 = sphi 0, %s153
      %s170 = sphi 0, %s154
    $region4: #{tpu_custom_call.1} parent=1 // loop_header_branch
      %17 = sbr.rel (%p15) target = $region8
    $region5: #{tpu_custom_call.1} parent=1 // loop_body
      %s19 = ssub.s32 %s14, 1
      %s20 = ssub.s32 %s14, 2
      %s27 = sadd.s32 1, %s22
      %p28 = scmp.ge.s32.totalorder %s27, 2
      %s29 = scalar_select %p28, 0, %s27
      %s30 = sadd.s32 1, %s21
      %s31 = scalar_select %p28, %s30, %s21
      %p32 = scmp.ge.s32.totalorder %s31, 2
      %s33 = scalar_select %p32, 0, %s31
      %s34 = ssub.s32 %s21, %s33
      %s35 = ssub.s32 %s22, %s29
      %s36 = sor.u32 %s34, %s35
      %p37 = scmp.eq.s32.totalorder %s36, 0
      %s39 = sadd.s32 %s38, 1
      %s40 = scalar_select %p37, %s38, %s39
      %p43 = pneg %p37
      %p44 = scmp.eq.s32.totalorder %s14, 3
      %p45 = por %p43, %p44
      %p46 = scmp.ne.s32.totalorder %s38, %s41
      %p47 = scmp.eq.s32.totalorder %s14, 0
      %p48 = por %p46, %p47
      %p49 = scmp.ne.s32.totalorder %s38, %s41
      %p50 = scmp.eq.s32.totalorder %s19, 3
      %p51 = por %p49, %p50
      %p52 = scmp.ne.s32.totalorder %s41, %s42
      %p53 = scmp.eq.s32.totalorder %s19, 0
      %p54 = por %p52, %p53
      %p55 = scmp.ne.s32.totalorder %s41, %s42
      %p56 = scmp.eq.s32.totalorder %s20, 3
      %p57 = por %p55, %p56
      %p59 = scmp.ne.s32.totalorder %s42, %s58
      %p60 = scmp.eq.s32.totalorder %s20, 0
      %p61 = por %p59, %p60
      %s63 = sadd.s32 %s62, 1
      %p66 = scmp.eq.s32.totalorder %s14, 3
      %p67 = scmp.ne.s32.totalorder %s62, %s64
      %p68 = scmp.eq.s32.totalorder %s14, 0
      %p69 = por %p67, %p68
      %p70 = scmp.ne.s32.totalorder %s62, %s64
      %p71 = scmp.eq.s32.totalorder %s19, 3
      %p72 = por %p70, %p71
      %p73 = scmp.ne.s32.totalorder %s64, %s65
      %p74 = scmp.eq.s32.totalorder %s19, 0
      %p75 = por %p73, %p74
      %p76 = scmp.ne.s32.totalorder %s64, %s65
      %p77 = scmp.eq.s32.totalorder %s20, 3
      %p78 = por %p76, %p77
      %p80 = scmp.ne.s32.totalorder %s65, %s79
      %p81 = scmp.eq.s32.totalorder %s20, 0
      %p82 = por %p80, %p81
      %s84 = sadd.s32 %s83, 1
      %p87 = scmp.eq.s32.totalorder %s14, 3
      %p88 = scmp.ne.s32.totalorder %s83, %s85
      %p89 = scmp.eq.s32.totalorder %s14, 0
      %p90 = por %p88, %p89
      %p91 = scmp.ne.s32.totalorder %s83, %s85
      %p92 = scmp.eq.s32.totalorder %s19, 3
      %p93 = por %p91, %p92
      %p94 = scmp.ne.s32.totalorder %s85, %s86
      %p95 = scmp.eq.s32.totalorder %s19, 0
      %p96 = por %p94, %p95
      %p97 = scmp.ne.s32.totalorder %s85, %s86
      %p98 = scmp.eq.s32.totalorder %s20, 3
      %p99 = por %p97, %p98
      %p101 = scmp.ne.s32.totalorder %s86, %s100
      %p102 = scmp.eq.s32.totalorder %s20, 0
      %p103 = por %p101, %p102
      %s105 = sadd.s32 %s104, 1
      %p108 = scmp.eq.s32.totalorder %s14, 3
      %p109 = scmp.ne.s32.totalorder %s104, %s106
      %p110 = scmp.eq.s32.totalorder %s14, 0
      %p111 = por %p109, %p110
      %p112 = scmp.ne.s32.totalorder %s104, %s106
      %p113 = scmp.eq.s32.totalorder %s19, 3
      %p114 = por %p112, %p113
      %p115 = scmp.ne.s32.totalorder %s106, %s107
      %p116 = scmp.eq.s32.totalorder %s19, 0
      %p117 = por %p115, %p116
      %p118 = scmp.ne.s32.totalorder %s106, %s107
      %p119 = scmp.eq.s32.totalorder %s20, 3
      %p120 = por %p118, %p119
      %p122 = scmp.ne.s32.totalorder %s107, %s121
      %p123 = scmp.eq.s32.totalorder %s20, 0
      %p124 = por %p122, %p123
      %s126 = sadd.s32 %s125, 1
      %p129 = scmp.eq.s32.totalorder %s14, 3
      %p130 = scmp.ne.s32.totalorder %s125, %s127
      %p131 = scmp.eq.s32.totalorder %s14, 0
      %p132 = por %p130, %p131
      %p133 = scmp.ne.s32.totalorder %s125, %s127
      %p134 = scmp.eq.s32.totalorder %s19, 3
      %p135 = por %p133, %p134
      %p136 = scmp.ne.s32.totalorder %s127, %s128
      %p137 = scmp.eq.s32.totalorder %s19, 0
      %p138 = por %p136, %p137
      %p139 = scmp.ne.s32.totalorder %s127, %s128
      %p140 = scmp.eq.s32.totalorder %s20, 3
      %p141 = por %p139, %p140
      %p143 = scmp.ne.s32.totalorder %s128, %s142
      %p144 = scmp.eq.s32.totalorder %s20, 0
      %p145 = por %p143, %p144
      %s146 = ssub.s32 %s21, %s33
      %s147 = ssub.s32 %s22, %s29
      %s148 = sor.u32 %s146, %s147
      %p149 = scmp.eq.s32.totalorder %s148, 0
      %s151 = sadd.s32 %s150, 1
      %s152 = scalar_select %p149, %s150, %s151
      %p155 = pneg %p149
      %p156 = scmp.eq.s32.totalorder %s14, 3
      %p157 = por %p155, %p156
      %p158 = scmp.ne.s32.totalorder %s150, %s153
      %p159 = scmp.eq.s32.totalorder %s14, 0
      %p160 = por %p158, %p159
      %p161 = scmp.ne.s32.totalorder %s150, %s153
      %p162 = scmp.eq.s32.totalorder %s19, 3
      %p163 = por %p161, %p162
      %p164 = scmp.ne.s32.totalorder %s153, %s154
      %p165 = scmp.eq.s32.totalorder %s19, 0
      %p166 = por %p164, %p165
      %p167 = scmp.ne.s32.totalorder %s153, %s154
      %p168 = scmp.eq.s32.totalorder %s20, 3
      %p169 = por %p167, %p168
      %p171 = scmp.ne.s32.totalorder %s154, %s170
      %p172 = scmp.eq.s32.totalorder %s20, 0
      %p173 = por %p171, %p172
      %p174 = scmp.le.s32.totalorder 1, %s14
      %p175 = scmp.lt.s32.totalorder %s14, 5
      %p176 = pnand %p174, %p175
      %p177 = pneg %p176
      // Predicated region
      $region9: #{tpu_custom_call.1} parent=5 // pred_check
        _
      $region10: #{tpu_custom_call.1} parent=5 // pred_check_branch
        %179 = sbr.rel (%p176) target = $region12
      $region11: #{tpu_custom_call.1} parent=5 // pred_region
        %s180 = ssub.s32 %s14, 1
        // Predicated region
        $region13: #{tpu_custom_call.1} parent=11 // pred_check
          %p181 = pneg %p75
        $region14: #{tpu_custom_call.1} parent=11 // pred_check_branch
          %183 = sbr.rel (%p181) target = $region16
        $region15: #{tpu_custom_call.1} parent=11 // pred_region
          _
        $region16: #{tpu_custom_call.1} parent=11 // pred_fallthru
          _
        // Predicated region
        $region17: #{tpu_custom_call.1} parent=11 // pred_check
          %p184 = pneg %p96
        $region18: #{tpu_custom_call.1} parent=11 // pred_check_branch
          %186 = sbr.rel (%p184) target = $region20
        $region19: #{tpu_custom_call.1} parent=11 // pred_region
          _
        $region20: #{tpu_custom_call.1} parent=11 // pred_fallthru
          _
        // Predicated region
        $region21: #{tpu_custom_call.1} parent=11 // pred_check
          %p187 = pneg %p117
        $region22: #{tpu_custom_call.1} parent=11 // pred_check_branch
          %189 = sbr.rel (%p187) target = $region24
        $region23: #{tpu_custom_call.1} parent=11 // pred_region
          _
        $region24: #{tpu_custom_call.1} parent=11 // pred_fallthru
          _
        // Predicated region
        $region25: #{tpu_custom_call.1} parent=11 // pred_check
          %p190 = pneg %p138
        $region26: #{tpu_custom_call.1} parent=11 // pred_check_branch
          %192 = sbr.rel (%p190) target = $region28
        $region27: #{tpu_custom_call.1} parent=11 // pred_region
          _
        $region28: #{tpu_custom_call.1} parent=11 // pred_fallthru
          _
      $region12: #{tpu_custom_call.1} parent=5 // pred_fallthru
        _
      %p193 = scmp.lt.s32.totalorder %s14, 4
      // Predicated region
      $region29: #{tpu_custom_call.1} parent=5 // pred_check
        %p194 = pneg %p193
      $region30: #{tpu_custom_call.1} parent=5 // pred_check_branch
        %196 = sbr.rel (%p194) target = $region32
      $region31: #{tpu_custom_call.1} parent=5 // pred_region
        // Predicated region
        $region33: #{tpu_custom_call.1} parent=31 // pred_check
          %p197 = pneg %p48
        $region34: #{tpu_custom_call.1} parent=31 // pred_check_branch
          %199 = sbr.rel (%p197) target = $region36
        $region35: #{tpu_custom_call.1} parent=31 // pred_region
          %p200 = scmp.lt.s32.totalorder %s21, 1
          %s201 = scalar_select %p200, %s21, 1
          %p202 = scmp.lt.s32.totalorder %s22, 1
          %s203 = scalar_select %p202, %s22, 1
          %s204 = smul.addr %s201, 2
          %s205 = sadd.s32 %s203, %s204
          %s206 = smul.addr %s205, 2
          %s207 = scalar_lea.vmem %s0, %s206
        $region36: #{tpu_custom_call.1} parent=31 // pred_fallthru
          _
      $region32: #{tpu_custom_call.1} parent=5 // pred_fallthru
        _
      %p208 = scmp.le.s32.totalorder 1, %s14
      %p209 = scmp.lt.s32.totalorder %s14, 5
      %p210 = pnand %p208, %p209
      %p211 = pneg %p210
      // Predicated region
      $region37: #{tpu_custom_call.1} parent=5 // pred_check
        _
      $region38: #{tpu_custom_call.1} parent=5 // pred_check_branch
        %213 = sbr.rel (%p210) target = $region40
      $region39: #{tpu_custom_call.1} parent=5 // pred_region
        %s214 = ssub.s32 %s14, 1
        %p215 = scmp.lt.s32.totalorder %s23, 1
        %s216 = scalar_select %p215, %s23, 1
        %p217 = scmp.lt.s32.totalorder %s24, 1
        %s218 = scalar_select %p217, %s24, 1
        %s219 = smul.addr %s216, 2
        %s220 = sadd.s32 %s218, %s219
        %s221 = smul.addr %s220, 2
        %s222 = scalar_lea.vmem %s0, %s221
        %p223 = pneg %p54
        %p224 = pneg %p51
        %p225 = pneg %p75
        %p226 = pneg %p72
        %p227 = pneg %p96
        %p228 = pneg %p93
        %p229 = pneg %p117
        %p230 = pneg %p114
        %p231 = pneg %p138
        %p232 = pneg %p135
        %p233 = pneg %p166
        %p234 = pneg %p163
        %s235 = sand.u32 %s153, 1
        %s236 = scalar_lea.sflag [#allocation3], %s235
        %s237 = sand.u32 %s153, 1
        %s238 = smul.addr %s237, 16
        %s239 = scalar_lea.vmem [#allocation2], %s238
        %p240 = scmp.lt.s32.totalorder %s23, 1
        %s241 = scalar_select %p240, %s23, 1
        %p242 = scmp.lt.s32.totalorder %s24, 1
        %s243 = scalar_select %p242, %s24, 1
        %s244 = smul.addr %s241, 2
        %s245 = sadd.s32 %s243, %s244
        %s246 = smul.addr %s245, 2
        %s247 = scalar_lea.vmem %s0, %s246
        %v249 = vld [vmem:[%s247] sm:$0x3]
        %v250 = vld [vmem:[%s1] sm:$0xf]
        %v251 = vld [vmem:[%s1 + $0x4] sm:$0xf]
        %v252 = vld [vmem:[%s1 + $0x8] sm:$0xf]
        %v253 = vld [vmem:[%s1 + $0xc] sm:$0xf]
        %v254 = vld [vmem:[%s2] sm:$0xff]
        %v255 = vld [vmem:[%s2 + $0x8] sm:$0xff]
        %v256 = vld [vmem:[%s2 + $0x10] sm:$0xff]
        %v257 = vld [vmem:[%s2 + $0x18] sm:$0xff]
        %259 = vset.pattern.permute.xlu0 0
        %260 = vperm.xlu0 %259, %v254
        %v261 = vpop.permute.xlu0 %260
        %264 = vset.pattern.permute.xlu0 0
        %265 = vperm.xlu0 %264, %v255
        %v266 = vpop.permute.xlu0 %265
        %269 = vset.pattern.permute.xlu0 0
        %270 = vperm.xlu0 %269, %v256
        %v271 = vpop.permute.xlu0 %270
        %274 = vset.pattern.permute.xlu0 0
        %275 = vperm.xlu0 %274, %v257
        %v276 = vpop.permute.xlu0 %275
        %v282 = vunpack.c.l.b16 %v250
        %v283 = vunpack.c.l.b16 %v251
        %v284 = vunpack.c.l.b16 %v252
        %v285 = vunpack.c.l.b16 %v253
        %v286 = vpack.c.b16 %v283, %v282
        %v287 = vpack.c.b16 %v285, %v284
        %vm288 = vcmask 31744
        %v290 = vsel %vm288, %v286, 0
        %v293 = vsel %vm288, %v287, 0
        %vm295 = vcmask 1041408
        %v297 = vsel %vm295, %v249, 0
        %299 = vmatprep.subr.bf16.mxu0 0
        %300 = vmatpush1.bf16.msra.mxu0 %v297
        %301 = vmatprep.subr.bf16.mxu0 0
        %302 = vmatpush1.bf16.msra.mxu0 0
        %303 = vmatprep.subr.bf16.mxu0 0
        %304 = vmatpush1.bf16.msra.mxu0 0
        %305 = vmatprep.subr.bf16.mxu0 0
        %306 = vmatpush1.bf16.msra.mxu0 0
        %307 = vmatprep.subr.bf16.mxu0 0
        %308 = vmatpush1.bf16.msra.mxu0 0
        %309 = vmatprep.subr.bf16.mxu0 0
        %310 = vmatpush1.bf16.msra.mxu0 0
        %311 = vmatprep.subr.bf16.mxu0 0
        %312 = vmatpush1.bf16.msra.mxu0 0
        %313 = vmatprep.subr.bf16.mxu0 0
        %314 = vmatpush1.bf16.msra.mxu0 0
        %315 = vmatprep.subr.bf16.mxu0 0
        %316 = vmatpush1.bf16.msra.mxu0 0
        %317 = vmatprep.subr.bf16.mxu0 0
        %318 = vmatpush1.bf16.msra.mxu0 0
        %319 = vmatprep.subr.bf16.mxu0 0
        %320 = vmatpush1.bf16.msra.mxu0 0
        %321 = vmatprep.subr.bf16.mxu0 0
        %322 = vmatpush1.bf16.msra.mxu0 0
        %323 = vmatprep.subr.bf16.mxu0 0
        %324 = vmatpush1.bf16.msra.mxu0 0
        %325 = vmatprep.subr.bf16.mxu0 0
        %326 = vmatpush1.bf16.msra.mxu0 0
        %327 = vmatprep.subr.bf16.mxu0 0
        %328 = vmatpush1.bf16.msra.mxu0 0
        %329 = vmatprep.subr.bf16.mxu0 0
        %330 = vmatpush1.bf16.msra.mxu0 0
        %331 = vmatprep.mubr.bf16.mxu0 0
        %332 = vmatmul.mubr.bf16.gmra.mrb[0].mxu0 %v290
        %v333 = vpop.f32.mrb[0].mxu0
        %v334 = vadd.f32 %v261, %v333
        %v335 = vpop.f32.mrb[0].mxu0
        %v336 = vpop.f32.mrb[0].mxu0
        %v337 = vadd.f32 %v266, %v336
        %v338 = vpop.f32.mrb[0].mxu0
        %339 = vmatprep.mubr.bf16.mxu0 0
        %340 = vmatmul.mubr.bf16.gmra.mrb[0].mxu0 %v293
        %v341 = vpop.f32.mrb[0].mxu0
        %v342 = vadd.f32 %v271, %v341
        %v343 = vpop.f32.mrb[0].mxu0
        %v344 = vpop.f32.mrb[0].mxu0
        %v345 = vadd.f32 %v276, %v344
        %v346 = vpop.f32.mrb[0].mxu0
        %347 = vdwg.mxu0
        %v348 = vld [vmem:[%s3] sm:$0xf]
        %v349 = vld [vmem:[%s3 + $0x4] sm:$0xf]
        %v350 = vld [vmem:[%s3 + $0x8] sm:$0xf]
        %v351 = vld [vmem:[%s3 + $0xc] sm:$0xf]
        %v352 = vpack.c.bf16 %v337, %v334
        %v353 = vpack.c.bf16 %v345, %v342
        %v354 = vld [vmem:[%s4] sm:$0xff]
        %v355 = vld [vmem:[%s4 + $0x8] sm:$0xff]
        %v356 = vld [vmem:[%s4 + $0x10] sm:$0xff]
        %v357 = vld [vmem:[%s4 + $0x18] sm:$0xff]
        %359 = vset.pattern.permute.xlu0 0
        %360 = vperm.xlu0 %359, %v354
        %v361 = vpop.permute.xlu0 %360
        %364 = vset.pattern.permute.xlu0 0
        %365 = vperm.xlu0 %364, %v355
        %v366 = vpop.permute.xlu0 %365
        %369 = vset.pattern.permute.xlu0 0
        %370 = vperm.xlu0 %369, %v356
        %v371 = vpop.permute.xlu0 %370
        %374 = vset.pattern.permute.xlu0 0
        %375 = vperm.xlu0 %374, %v357
        %v376 = vpop.permute.xlu0 %375
        %v382 = vunpack.c.l.b16 %v348
        %v383 = vunpack.c.l.b16 %v349
        %v384 = vunpack.c.l.b16 %v350
        %v385 = vunpack.c.l.b16 %v351
        %v386 = vpack.c.b16 %v383, %v382
        %v387 = vpack.c.b16 %v385, %v384
        %vm388 = vcmask 261120
        %v390 = vsel %vm388, %v386, 0
        %v393 = vsel %vm388, %v387, 0
        %395 = vmatprep.subr.bf16.mxu0 0
        %396 = vmatpush1.bf16.msra.mxu0 %v352
        %397 = vmatprep.subr.bf16.mxu0 0
        %398 = vmatpush1.bf16.msra.mxu0 %v353
        %399 = vmatprep.subr.bf16.mxu0 0
        %400 = vmatpush1.bf16.msra.mxu0 0
        %401 = vmatprep.subr.bf16.mxu0 0
        %402 = vmatpush1.bf16.msra.mxu0 0
        %403 = vmatprep.subr.bf16.mxu0 0
        %404 = vmatpush1.bf16.msra.mxu0 0
        %405 = vmatprep.subr.bf16.mxu0 0
        %406 = vmatpush1.bf16.msra.mxu0 0
        %407 = vmatprep.subr.bf16.mxu0 0
        %408 = vmatpush1.bf16.msra.mxu0 0
        %409 = vmatprep.subr.bf16.mxu0 0
        %410 = vmatpush1.bf16.msra.mxu0 0
        %411 = vmatprep.subr.bf16.mxu0 0
        %412 = vmatpush1.bf16.msra.mxu0 0
        %413 = vmatprep.subr.bf16.mxu0 0
        %414 = vmatpush1.bf16.msra.mxu0 0
        %415 = vmatprep.subr.bf16.mxu0 0
        %416 = vmatpush1.bf16.msra.mxu0 0
        %417 = vmatprep.subr.bf16.mxu0 0
        %418 = vmatpush1.bf16.msra.mxu0 0
        %419 = vmatprep.subr.bf16.mxu0 0
        %420 = vmatpush1.bf16.msra.mxu0 0
        %421 = vmatprep.subr.bf16.mxu0 0
        %422 = vmatpush1.bf16.msra.mxu0 0
        %423 = vmatprep.subr.bf16.mxu0 0
        %424 = vmatpush1.bf16.msra.mxu0 0
        %425 = vmatprep.subr.bf16.mxu0 0
        %426 = vmatpush1.bf16.msra.mxu0 0
        %427 = vmatprep.mubr.bf16.mxu0 0
        %428 = vmatmul.mubr.bf16.gmra.mrb[0].mxu0 %v390
        %v429 = vpop.f32.mrb[0].mxu0
        %v430 = vadd.f32 %v361, %v429
        %v431 = vpop.f32.mrb[0].mxu0
        %v432 = vpop.f32.mrb[0].mxu0
        %v433 = vadd.f32 %v366, %v432
        %v434 = vpop.f32.mrb[0].mxu0
        %435 = vmatprep.mubr.bf16.mxu0 0
        %436 = vmatmul.mubr.bf16.gmra.mrb[0].mxu0 %v393
        %v437 = vpop.f32.mrb[0].mxu0
        %v438 = vadd.f32 %v371, %v437
        %v439 = vpop.f32.mrb[0].mxu0
        %v440 = vpop.f32.mrb[0].mxu0
        %v441 = vadd.f32 %v376, %v440
        %v442 = vpop.f32.mrb[0].mxu0
        %443 = vdwg.mxu0
        %v444 = vpack.c.bf16 %v433, %v430
        %v445 = vpack.c.bf16 %v441, %v438
        %v448 = vunpack.c.l.b16 %v444
        %v449 = vunpack.c.h.b16 %v444
        %v450 = vunpack.c.l.b16 %v445
        %v451 = vunpack.c.h.b16 %v445
        %v452 = vpack.c.b16 %v448, %v448
        %v453 = vpack.c.b16 %v449, %v449
        %v454 = vpack.c.b16 %v450, %v450
        %v455 = vpack.c.b16 %v451, %v451
        %460 = vst [vmem:[%s239] sm:$0xf] %v452
        %461 = vst [vmem:[%s239 + $0x4] sm:$0xf] %v453
        %462 = vst [vmem:[%s239 + $0x8] sm:$0xf] %v454
        %463 = vst [vmem:[%s239 + $0xc] sm:$0xf] %v455
        %s464 = sand.u32 %s153, 1
        %s465 = scalar_lea.sflag [#allocation3], %s464
        %s466 = sand.u32 %s153, 1
        %s467 = smul.addr %s466, 16
        %s468 = scalar_lea.vmem [#allocation2], %s467
        // Predicated region
        $region41: #{tpu_custom_call.1} parent=39 // pred_check
          %p469 = pneg %p163
        $region42: #{tpu_custom_call.1} parent=39 // pred_check_branch
          %471 = sbr.rel (%p469) target = $region44
        $region43: #{tpu_custom_call.1} parent=39 // pred_region
          %s473 = ssub.s32 256, 256
          %474 = vsyncadd %s465, %s473
          %s475 = smul.addr %s23, 8
          %s476 = sadd.s32 %s24, %s475
          %s477 = smul.addr %s476, 64
          %s478 = scalar_lea.hbm %s5, %s477
          %s479 = sshll.u32 %s468, 4
          %s480 = int_to_ptr.vmem [resolvable:$true] %s479
          %485 = dma.vmem_to_hbm [thread:$0]  %s480, 256, %s478, %s465, 64, 128, 4
        $region44: #{tpu_custom_call.1} parent=39 // pred_fallthru
          _
      $region40: #{tpu_custom_call.1} parent=5 // pred_fallthru
        _
      %p486 = scmp.le.s32.totalorder 2, %s14
      // Predicated region
      $region45: #{tpu_custom_call.1} parent=5 // pred_check
        %p487 = pneg %p486
      $region46: #{tpu_custom_call.1} parent=5 // pred_check_branch
        %489 = sbr.rel (%p487) target = $region48
      $region47: #{tpu_custom_call.1} parent=5 // pred_region
        %s490 = ssub.s32 %s14, 2
        // Predicated region
        $region49: #{tpu_custom_call.1} parent=47 // pred_check
          %p491 = pneg %p169
        $region50: #{tpu_custom_call.1} parent=47 // pred_check_branch
          %493 = sbr.rel (%p491) target = $region52
        $region51: #{tpu_custom_call.1} parent=47 // pred_region
          %s494 = sand.u32 %s154, 1
          %s495 = scalar_lea.sflag [#allocation3], %s494
          %s496 = sand.u32 %s154, 1
          %s497 = smul.addr %s496, 16
          %s498 = scalar_lea.vmem [#allocation2], %s497
          %499 = dma.done %s495, 256
        $region52: #{tpu_custom_call.1} parent=47 // pred_fallthru
          _
      $region48: #{tpu_custom_call.1} parent=5 // pred_fallthru
        _
    $region6: #{tpu_custom_call.1} parent=1 // loop_footer
      %s18 = sadd.s32 1, %s14
    $region7: #{tpu_custom_call.1} parent=1 // loop_footer_branch
      %13 = sbr.rel target = $region3
    $region8: #{tpu_custom_call.1} parent=1 // loop_exit
      _
    %500 = vsyncpa [#allocation3], 1
    %s501 = scalar_lea.sflag [#allocation3], 1
    %502 = vsyncpa %s501, 1

</llo_original>
